<compile_context>
chip_gen: v6e
topology: v6e:2x2x1
jax: 0.10.0
libtpu: 0.0.40
codegen_flags: <defaults>
</compile_context>

<pallas_src>
import jax
import jax.numpy as jnp
from jax.experimental import pallas as pl
from jax.experimental.pallas import tpu as pltpu


def aff_kernel(x_ref, r_ref, xg_ref, w1_ref, b1_ref, w2_ref, o_ref):
    # Block shapes: x/r/o (1, C, TM) activation dtype; xg (1, C, 1) f32;
    #               w1 (Ci, C) / w2 (C, Ci) compute dtype; b1 (Ci, 1) f32.
    # w2 and xg already carry the 1/2 factor of the tanh form, and xg folds in
    # the conv2 bias + the whole (precomputed) global branch.
    x = x_ref[0]
    res = r_ref[0]
    xa = x + res                                           # (C, TM)

    # local attention: 1x1 conv (BN folded) -> ReLU -> 1x1 conv (BN folded, *0.5)
    h = jnp.dot(w1_ref[...], xa, preferred_element_type=jnp.float32)
    h = jnp.maximum(h + b1_ref[...], 0.0)                  # (Ci, TM) f32
    z = jnp.dot(w2_ref[...], h.astype(w2_ref.dtype),
                preferred_element_type=jnp.float32) + xg_ref[0]   # (C, TM) f32

    # 2*x*sig(s) + 2*res*(1-sig(s)) == (x+res) + (x-res)*tanh(s/2).
    # tanh runs on the EUP (free slot).  Ragged last spatial tile: padding
    # lanes flow through tanh on stale data, but the matmuls contract over C
    # (sublanes, not lanes) and the boundary store is masked, so valid outputs
    # cannot be contaminated -- do NOT "fix" this with an explicit mask.
    t = jnp.tanh(z)
    diff = (x - res).astype(jnp.float32)
    o_ref[0] = (xa.astype(jnp.float32) + diff * t).astype(o_ref.dtype)


def fold_bn(w, b, gamma, beta, mean, var, eps=1e-5):
    """Fold inference-mode BatchNorm into a preceding (Cin, Cout) 1x1 conv."""
    scale = gamma / jnp.sqrt(var + eps)
    return w * scale[None, :], (b - mean) * scale + beta


def _vmem_capacity_bytes():
    """Per-TensorCore VMEM of the actual chip; conservative fallback."""
    try:
        info = pltpu.get_tpu_info()
        cap = getattr(info, "vmem_capacity_bytes", None)
        if cap:
            return int(cap)
    except Exception:
        pass
    return 64 << 20  # v7x per-TC VMEM (smallest of the supported generations)


def _pick_spatial_tile(hw, c, ci, itemsize, budget_bytes, max_tm=2048):
    """Biggest lane-dense spatial tile that fits the VMEM budget.

    Per-lane VMEM cost: 3 double-buffered I/O slabs (x, r, o) of C x itemsize
    plus the in-kernel f32 intermediates (xa/diff/t ~ 3-4 x C x 4B) plus the
    hidden slab h (Ci x (4 + itemsize) B).  Measured tiling data shows 512-1024
    lanes already reach ~85% of the HBM roofline, so cap at 2048.
    """
    per_lane = c * (6 * itemsize + 16) + ci * (4 + itemsize)
    cap = max(128, budget_bytes // per_lane)
    cap = min(cap, max_tm)
    if hw <= cap:
        return hw                     # block == full dim is always legal
    return max(128, (cap // 128) * 128)


def aff_forward(x_nchw, residual_nchw, params, eps=1e-5):
    B, C, H, W = x_nchw.shape
    HW = H * W
    dtype = x_nchw.dtype
    f32 = jnp.float32
    compute_dtype = jnp.bfloat16 if dtype == jnp.bfloat16 else f32

    # NCHW -> (B, C, HW): free reshape, no transpose / extra HBM pass.
    x = x_nchw.reshape(B, C, HW)
    r = residual_nchw.reshape(B, C, HW)

    # Fold BN into the 1x1 convs of both branches (weights stored (Cin, Cout)).
    w1l, b1l = fold_bn(params["l_w1"], params["l_b1"], params["l_bn1_g"],
                       params["l_bn1_b"], params["l_bn1_m"], params["l_bn1_v"], eps)
    w2l, b2l = fold_bn(params["l_w2"], params["l_b2"], params["l_bn2_g"],
                       params["l_bn2_b"], params["l_bn2_m"], params["l_bn2_v"], eps)
    w1g, b1g = fold_bn(params["g_w1"], params["g_b1"], params["g_bn1_g"],
                       params["g_bn1_b"], params["g_bn1_m"], params["g_bn1_v"], eps)
    w2g, b2g = fold_bn(params["g_w2"], params["g_b2"], params["g_bn2_g"],
                       params["g_bn2_b"], params["g_bn2_m"], params["g_bn2_v"], eps)
    Ci = w1l.shape[1]

    # ---- global branch hoisted out of the kernel.  mean(x + r) == mean(x) +
    # mean(r); two streaming reduces with f32 accumulation so no f32 (B, C, HW)
    # temporary can be materialized in HBM.
    xm = (jnp.mean(x, axis=2, dtype=f32) +
          jnp.mean(r, axis=2, dtype=f32))                        # (B, C)
    g = jnp.maximum(xm @ w1g + b1g[None, :], 0.0)                # (B, Ci)
    xg_global = g @ w2g + b2g[None, :]                           # (B, C)

    # Fold the 1/2 of the tanh form and the conv2 bias into w2 / xg.
    w1k = jnp.transpose(w1l).astype(compute_dtype)               # (Ci, C)
    b1k = b1l.reshape(Ci, 1).astype(f32)                         # (Ci, 1)
    w2k = (0.5 * jnp.transpose(w2l)).astype(compute_dtype)       # (C, Ci)
    xg = (0.5 * (xg_global + b2l[None, :]))[:, :, None].astype(f32)  # (B, C, 1)

    # ---- tiling / VMEM budget derived from the actual chip.
    vmem_cap = _vmem_capacity_bytes()
    vmem_limit = min((vmem_cap * 3) // 4, 64 << 20)   # <=48 MiB on v7x, 64 MiB on v5e/v6e
    tile_budget = vmem_limit // 2
    TM = _pick_spatial_tile(HW, C, Ci, jnp.dtype(dtype).itemsize, tile_budget)
    nS = pl.cdiv(HW, TM)

    # v7x megacore: make sure there are >= 2 grid points so both TensorCores
    # get work (only possible lane-dense if HW >= 256).
    if B * nS < 2 and HW >= 256:
        TM = pl.cdiv(pl.cdiv(HW, 2), 128) * 128
        nS = pl.cdiv(HW, TM)

    act_spec = pl.BlockSpec((1, C, TM), lambda b, s: (b, 0, s))
    full = lambda shape: pl.BlockSpec(shape, lambda b, s: (0,) * len(shape))

    out = pl.pallas_call(
        aff_kernel,
        out_shape=jax.ShapeDtypeStruct((B, C, HW), dtype),
        grid=(B, nS),
        in_specs=[
            act_spec,                                          # x
            act_spec,                                          # residual
            pl.BlockSpec((1, C, 1), lambda b, s: (b, 0, 0)),   # fused (C,1) bias
            full((Ci, C)),                                     # local conv1 W
            full((Ci, 1)),                                     # local conv1 b
            full((C, Ci)),                                     # local conv2 W (*0.5)
        ],
        out_specs=act_spec,
        compiler_params=pltpu.CompilerParams(
            dimension_semantics=("parallel", "parallel"),
            vmem_limit_bytes=int(vmem_limit),
        ),
    )(x, r, xg, w1k, b1k, w2k)

    return out.reshape(B, C, H, W)


def make_params(key, channels, r):
    inter = channels // r
    ks = jax.random.split(key, 24)
    i = iter(range(24))
    nrm = lambda k, s: 0.1 * jax.random.normal(k, s, dtype=jnp.float32)

    def bn(k1, k2, k3, k4, c):
        return (1.0 + nrm(k1, (c,)),            # gamma
                nrm(k2, (c,)),                  # beta
                nrm(k3, (c,)),                  # running mean
                0.5 + jnp.abs(jax.random.normal(k4, (c,), dtype=jnp.float32)) * 0.5)

    p = {}
    # local branch
    p["l_w1"] = nrm(ks[next(i)], (channels, inter)); p["l_b1"] = nrm(ks[next(i)], (inter,))
    p["l_bn1_g"], p["l_bn1_b"], p["l_bn1_m"], p["l_bn1_v"] = bn(ks[next(i)], ks[next(i)], ks[next(i)], ks[next(i)], inter)
    p["l_w2"] = nrm(ks[next(i)], (inter, channels)); p["l_b2"] = nrm(ks[next(i)], (channels,))
    p["l_bn2_g"], p["l_bn2_b"], p["l_bn2_m"], p["l_bn2_v"] = bn(ks[next(i)], ks[next(i)], ks[next(i)], ks[next(i)], channels)
    # global branch
    p["g_w1"] = nrm(ks[next(i)], (channels, inter)); p["g_b1"] = nrm(ks[next(i)], (inter,))
    p["g_bn1_g"], p["g_bn1_b"], p["g_bn1_m"], p["g_bn1_v"] = bn(ks[next(i)], ks[next(i)], ks[next(i)], ks[next(i)], inter)
    p["g_w2"] = nrm(ks[next(i)], (inter, channels)); p["g_b2"] = nrm(ks[next(i)], (channels,))
    p["g_bn2_g"], p["g_bn2_b"], p["g_bn2_m"], p["g_bn2_v"] = bn(ks[next(i)], ks[next(i)], ks[next(i)], ks[next(i)], channels)
    return p


def aff_reference(x_nchw, r_nchw, params):
    """Pure-JAX reference (NCHW, inference-mode BN) for validation."""
    def bn(z, g, b, m, v, eps=1e-5):  # z: (B, C, H, W)
        s = g / jnp.sqrt(v + eps)
        return z * s[None, :, None, None] + (b - m * s)[None, :, None, None]

    def conv1x1(z, w, b):             # w: (Cin, Cout)
        return jnp.einsum("bchw,cd->bdhw", z, w) + b[None, :, None, None]

    xa = x_nchw + r_nchw
    xl = conv1x1(xa, params["l_w1"], params["l_b1"])
    xl = bn(xl, params["l_bn1_g"], params["l_bn1_b"], params["l_bn1_m"], params["l_bn1_v"])
    xl = jnp.maximum(xl, 0.0)
    xl = conv1x1(xl, params["l_w2"], params["l_b2"])
    xl = bn(xl, params["l_bn2_g"], params["l_bn2_b"], params["l_bn2_m"], params["l_bn2_v"])

    xp = jnp.mean(xa, axis=(2, 3), keepdims=True)
    xg = conv1x1(xp, params["g_w1"], params["g_b1"])
    xg = bn(xg, params["g_bn1_g"], params["g_bn1_b"], params["g_bn1_m"], params["g_bn1_v"])
    xg = jnp.maximum(xg, 0.0)
    xg = conv1x1(xg, params["g_w2"], params["g_b2"])
    xg = bn(xg, params["g_bn2_g"], params["g_bn2_b"], params["g_bn2_m"], params["g_bn2_v"])

    wei = jax.nn.sigmoid(xl + xg)
    return 2.0 * x_nchw * wei + 2.0 * r_nchw * (1.0 - wei)


if __name__ == "__main__":
    channels, r = 64, 4

    key = jax.random.PRNGKey(0)
    kx, kr, kp, kx2, kr2 = jax.random.split(key, 5)
    params = make_params(kp, channels, r)

    # ---- f32 path (all-f32 internal compute) ----
    B, H, W = 2, 8, 8
    x = jax.random.normal(kx, (B, channels, H, W), dtype=jnp.float32)
    residual = jax.random.normal(kr, (B, channels, H, W), dtype=jnp.float32)
    out = jax.block_until_ready(aff_forward(x, residual, params))
    ref = aff_reference(x, residual, params)
    if not jnp.allclose(out, ref, atol=1e-3, rtol=1e-3):
        err = float(jnp.max(jnp.abs(out - ref)))
        raise AssertionError(f"Pallas AFF kernel (f32) mismatch vs JAX reference (max abs err {err})")

    # ---- bf16 activation path (bf16 MXU operands, f32 accumulation) ----
    B2, H2, W2 = 2, 16, 16
    x2 = jax.random.normal(kx2, (B2, channels, H2, W2), dtype=jnp.float32)
    r2 = jax.random.normal(kr2, (B2, channels, H2, W2), dtype=jnp.float32)
    xb = x2.astype(jnp.bfloat16)
    rb = r2.astype(jnp.bfloat16)
    out_b = jax.block_until_ready(aff_forward(xb, rb, params))
    if out_b.dtype != jnp.bfloat16:
        raise AssertionError("bf16 path did not preserve activation dtype")
    ref_b = aff_reference(xb.astype(jnp.float32), rb.astype(jnp.float32), params)
    if not jnp.allclose(out_b.astype(jnp.float32), ref_b, atol=1e-1, rtol=5e-2):
        err = float(jnp.max(jnp.abs(out_b.astype(jnp.float32) - ref_b)))
        raise AssertionError(f"Pallas AFF kernel (bf16) mismatch vs JAX reference (max abs err {err})")

    print("KERNEL_OK")
</pallas_src>

<mosaic_0001>
module attributes {stable_mosaic.version = 11 : i64} {
  func.func @aff_kernel(%arg0: i32, %arg1: i32, %arg2: memref<1x64x64xf32, #tpu.memory_space<vmem>>, %arg3: memref<1x64x64xf32, #tpu.memory_space<vmem>>, %arg4: memref<1x64x1xf32, #tpu.memory_space<vmem>>, %arg5: memref<16x64xf32, #tpu.memory_space<vmem>>, %arg6: memref<16x1xf32, #tpu.memory_space<vmem>>, %arg7: memref<64x16xf32, #tpu.memory_space<vmem>>, %arg8: memref<1x64x64xf32, #tpu.memory_space<vmem>>) attributes {dimension_semantics = [#tpu.dimension_semantics<parallel>, #tpu.dimension_semantics<parallel>], iteration_bounds = array<i64: 2, 1>, scalar_prefetch = 0 : i64, scratch_operands = 0 : i64, tpu.core_type = #tpu.core_type<tc>, window_params = [{transform_indices = @transform_0, window_bounds = array<i64: 1, 64, 64>}, {transform_indices = @transform_1, window_bounds = array<i64: 1, 64, 64>}, {transform_indices = @transform_2, window_bounds = array<i64: 1, 64, 1>}, {pipeline_mode = #tpu.pipeline_mode<synchronous>, transform_indices = @transform_3, window_bounds = array<i64: 16, 64>}, {pipeline_mode = #tpu.pipeline_mode<synchronous>, transform_indices = @transform_4, window_bounds = array<i64: 16, 1>}, {pipeline_mode = #tpu.pipeline_mode<synchronous>, transform_indices = @transform_5, window_bounds = array<i64: 64, 16>}, {transform_indices = @transform_6, window_bounds = array<i64: 1, 64, 64>}]} {
    %c0 = arith.constant 0 : index
    %c0_0 = arith.constant 0 : index
    %c0_1 = arith.constant 0 : index
    %0 = vector.load %arg2[%c0, %c0_0, %c0_1] : memref<1x64x64xf32, #tpu.memory_space<vmem>>, vector<1x64x64xf32>
    %1 = vector.shape_cast %0 : vector<1x64x64xf32> to vector<64x64xf32>
    %c0_2 = arith.constant 0 : index
    %c0_3 = arith.constant 0 : index
    %c0_4 = arith.constant 0 : index
    %2 = vector.load %arg3[%c0_2, %c0_3, %c0_4] : memref<1x64x64xf32, #tpu.memory_space<vmem>>, vector<1x64x64xf32>
    %3 = vector.shape_cast %2 : vector<1x64x64xf32> to vector<64x64xf32>
    %4 = arith.addf %1, %3 : vector<64x64xf32>
    %c0_5 = arith.constant 0 : index
    %c0_6 = arith.constant 0 : index
    %5 = vector.load %arg5[%c0_5, %c0_6] : memref<16x64xf32, #tpu.memory_space<vmem>>, vector<16x64xf32>
    %cst = arith.constant dense<0.000000e+00> : vector<16x64xf32>
    %6 = tpu.matmul %5, %4, %cst {dimension_numbers = #tpu.dot_dimension_numbers<[1], [0], [0], [1], [0, 0, 1, 1], [], []>} : vector<16x64xf32>, vector<64x64xf32>, vector<16x64xf32> -> vector<16x64xf32>
    %c0_7 = arith.constant 0 : index
    %c0_8 = arith.constant 0 : index
    %7 = vector.load %arg6[%c0_7, %c0_8] : memref<16x1xf32, #tpu.memory_space<vmem>>, vector<16x1xf32>
    %8 = vector.broadcast %7 : vector<16x1xf32> to vector<16x64xf32>
    %9 = arith.addf %6, %8 : vector<16x64xf32>
    %cst_9 = arith.constant 0.000000e+00 : f32
    %10 = vector.broadcast %cst_9 : f32 to vector<16x64xf32>
    %11 = arith.maximumf %9, %10 : vector<16x64xf32>
    %c0_10 = arith.constant 0 : index
    %c0_11 = arith.constant 0 : index
    %12 = vector.load %arg7[%c0_10, %c0_11] : memref<64x16xf32, #tpu.memory_space<vmem>>, vector<64x16xf32>
    %cst_12 = arith.constant dense<0.000000e+00> : vector<64x64xf32>
    %13 = tpu.matmul %12, %11, %cst_12 {dimension_numbers = #tpu.dot_dimension_numbers<[1], [0], [0], [1], [0, 0, 1, 1], [], []>} : vector<64x16xf32>, vector<16x64xf32>, vector<64x64xf32> -> vector<64x64xf32>
    %c0_13 = arith.constant 0 : index
    %c0_14 = arith.constant 0 : index
    %c0_15 = arith.constant 0 : index
    %14 = vector.load %arg4[%c0_13, %c0_14, %c0_15] : memref<1x64x1xf32, #tpu.memory_space<vmem>>, vector<1x64x1xf32>
    %15 = vector.shape_cast %14 : vector<1x64x1xf32> to vector<64x1xf32>
    %16 = vector.broadcast %15 : vector<64x1xf32> to vector<64x64xf32>
    %17 = arith.addf %13, %16 : vector<64x64xf32>
    %18 = math.tanh %17 : vector<64x64xf32>
    %19 = arith.subf %1, %3 : vector<64x64xf32>
    %20 = arith.mulf %19, %18 : vector<64x64xf32>
    %21 = arith.addf %4, %20 : vector<64x64xf32>
    %c0_16 = arith.constant 0 : index
    %c0_17 = arith.constant 0 : index
    %c0_18 = arith.constant 0 : index
    %22 = vector.load %arg8[%c0_16, %c0_17, %c0_18] : memref<1x64x64xf32, #tpu.memory_space<vmem>>, vector<1x64x64xf32>
    %23 = vector.shape_cast %22 : vector<1x64x64xf32> to vector<64x64xf32>
    %24 = vector.shape_cast %21 : vector<64x64xf32> to vector<1x64x64xf32>
    tpu.vector_store %arg8[%c0_16, %c0_17, %c0_18], %24 {strides = array<i32>} : memref<1x64x64xf32, #tpu.memory_space<vmem>>, vector<1x64x64xf32>,
    return
  }
  func.func @transform_0(%arg0: i32, %arg1: i32) -> (i32, i32, i32) {
    %c0_i32 = arith.constant 0 : i32
    %c0_i32_0 = arith.constant 0 : i32
    return %arg0, %c0_i32, %arg1 : i32, i32, i32
  }
  func.func @transform_1(%arg0: i32, %arg1: i32) -> (i32, i32, i32) {
    %c0_i32 = arith.constant 0 : i32
    %c0_i32_0 = arith.constant 0 : i32
    return %arg0, %c0_i32, %arg1 : i32, i32, i32
  }
  func.func @transform_2(%arg0: i32, %arg1: i32) -> (i32, i32, i32) {
    %c0_i32 = arith.constant 0 : i32
    %c0_i32_0 = arith.constant 0 : i32
    %c0_i32_1 = arith.constant 0 : i32
    return %arg0, %c0_i32, %c0_i32_0 : i32, i32, i32
  }
  func.func @transform_3(%arg0: i32, %arg1: i32) -> (i32, i32) {
    %c0_i32 = arith.constant 0 : i32
    %c0_i32_0 = arith.constant 0 : i32
    %c0_i32_1 = arith.constant 0 : i32
    return %c0_i32, %c0_i32_0 : i32, i32
  }
  func.func @transform_4(%arg0: i32, %arg1: i32) -> (i32, i32) {
    %c0_i32 = arith.constant 0 : i32
    %c0_i32_0 = arith.constant 0 : i32
    %c0_i32_1 = arith.constant 0 : i32
    return %c0_i32, %c0_i32_0 : i32, i32
  }
  func.func @transform_5(%arg0: i32, %arg1: i32) -> (i32, i32) {
    %c0_i32 = arith.constant 0 : i32
    %c0_i32_0 = arith.constant 0 : i32
    %c0_i32_1 = arith.constant 0 : i32
    return %c0_i32, %c0_i32_0 : i32, i32
  }
  func.func @transform_6(%arg0: i32, %arg1: i32) -> (i32, i32, i32) {
    %c0_i32 = arith.constant 0 : i32
    %c0_i32_0 = arith.constant 0 : i32
    return %arg0, %c0_i32, %arg1 : i32, i32, i32
  }
}

</mosaic_0001>

<llo_original>
// kernel: tpu_custom_call.1
$region0: #{tpu_custom_call.1}
  #allocation0 [shape = 'u32[]', space=smem, size = 0x4, offset = 0x4, fixed_abs, tag = 'smem constant byte address 0x4 - core index']
  #allocation1 [shape = 'u32[144,128]{1,0:T(1,128)}', space=vmem, size = 0x12000, scoped, tag = 'internal scratch']
  %s0 = inlined_call_operand.vmem [shape: f32[2,64,64], index: 0, kind: input, shape index: {}]
  %s1 = inlined_call_operand.hbm [shape: f32[2,64,64], index: 1, kind: input, shape index: {}]
  %s2 = inlined_call_operand.vmem [shape: f32[2,64,1], index: 2, kind: input, shape index: {}]
  %s3 = inlined_call_operand.vmem [shape: f32[16,64], index: 3, kind: input, shape index: {}]
  %s4 = inlined_call_operand.vmem [shape: f32[16,1], index: 4, kind: input, shape index: {}]
  %s5 = inlined_call_operand.vmem [shape: f32[64,16], index: 5, kind: input, shape index: {}]
  %s6 = inlined_call_operand.hbm [shape: f32[2,64,64], index: 6, kind: output, shape index: {}]
  %s7 = sld [smem:[#allocation0]]
  $region61: #{tpu_custom_call.1} parent=0
    _
  %s9 = ssub.s32 1, %s7
  %s10 = scalar_select 0, %s9, %s7
  $region1: #{tpu_custom_call.1} parent=0
    #allocation2 [shape = 'u8[65536]{0}', space=vmem, size = 0x10000, scoped, tag = 'input window, operand 1']
    #allocation3 [shape = 's32[2]{0}', space=sflag, size = 0x8, scoped, tag = 'scoped memory for tpu_custom_call.1']
    #allocation4 [shape = 's32[2]{0}', space=sflag, size = 0x8, scoped, tag = 'scoped memory for tpu_custom_call.1']
    #allocation5 [shape = 'u8[65536]{0}', space=vmem, size = 0x10000, scoped, tag = 'output window, operand 0']
    %11 = vsyncpa [#allocation3], 0
    %s12 = scalar_lea.sflag [#allocation3], 1
    %13 = vsyncpa %s12, 0
    %14 = vsyncpa [#allocation4], 0
    %s15 = scalar_lea.sflag [#allocation4], 1
    %16 = vsyncpa %s15, 0
    loop: start=0, step=1, limit=4
    $region2: #{tpu_custom_call.1} parent=1 // loop_pre_header
      _
    $region3: #{tpu_custom_call.1} parent=1 // loop_header
      %s18 = sphi 0, %s22
      %p19 = scmp.ge.s32.totalorder %s18, 4
      %s25 = sphi 0, %s37
      %s26 = sphi 0, %s33
      %s27 = sphi 0, %s25
      %s28 = sphi 0, %s26
      %s29 = sphi 0, %s27
      %s30 = sphi 0, %s28
      %s42 = sphi 0, %s44
      %s45 = sphi 0, %s42
      %s46 = sphi 0, %s45
      %s62 = sphi 0, %s46
      %s70 = sphi 0, %s72
      %s73 = sphi 0, %s70
      %s74 = sphi 0, %s73
      %s90 = sphi 0, %s74
      %s96 = sphi 0, %s98
      %s99 = sphi 0, %s96
      %s100 = sphi 0, %s99
      %s116 = sphi 0, %s100
      %s120 = sphi 0, %s120
      %s122 = sphi 0, %s120
      %s123 = sphi 0, %s122
      %s137 = sphi 0, %s123
      %s141 = sphi 0, %s141
      %s143 = sphi 0, %s141
      %s144 = sphi 0, %s143
      %s158 = sphi 0, %s144
      %s162 = sphi 0, %s162
      %s164 = sphi 0, %s162
      %s165 = sphi 0, %s164
      %s179 = sphi 0, %s165
      %s187 = sphi 0, %s189
      %s190 = sphi 0, %s187
      %s191 = sphi 0, %s190
      %s207 = sphi 0, %s191
    $region4: #{tpu_custom_call.1} parent=1 // loop_header_branch
      %21 = sbr.rel (%p19) target = $region8
    $region5: #{tpu_custom_call.1} parent=1 // loop_body
      %s23 = ssub.s32 %s18, 1
      %s24 = ssub.s32 %s18, 2
      %s31 = sadd.s32 1, %s26
      %p32 = scmp.ge.s32.totalorder %s31, 1
      %s33 = scalar_select %p32, 0, %s31
      %s34 = sadd.s32 1, %s25
      %s35 = scalar_select %p32, %s34, %s25
      %p36 = scmp.ge.s32.totalorder %s35, 2
      %s37 = scalar_select %p36, 0, %s35
      %s38 = ssub.s32 %s25, %s37
      %s39 = ssub.s32 %s26, %s33
      %s40 = sor.u32 %s38, %s39
      %p41 = scmp.eq.s32.totalorder %s40, 0
      %s43 = sadd.s32 %s42, 1
      %s44 = scalar_select %p41, %s42, %s43
      %p47 = pneg %p41
      %p48 = scmp.eq.s32.totalorder %s18, 1
      %p49 = por %p47, %p48
      %p50 = scmp.ne.s32.totalorder %s42, %s45
      %p51 = scmp.eq.s32.totalorder %s18, 0
      %p52 = por %p50, %p51
      %p53 = scmp.ne.s32.totalorder %s42, %s45
      %p54 = scmp.eq.s32.totalorder %s23, 1
      %p55 = por %p53, %p54
      %p56 = scmp.ne.s32.totalorder %s45, %s46
      %p57 = scmp.eq.s32.totalorder %s23, 0
      %p58 = por %p56, %p57
      %p59 = scmp.ne.s32.totalorder %s45, %s46
      %p60 = scmp.eq.s32.totalorder %s24, 1
      %p61 = por %p59, %p60
      %p63 = scmp.ne.s32.totalorder %s46, %s62
      %p64 = scmp.eq.s32.totalorder %s24, 0
      %p65 = por %p63, %p64
      %s66 = ssub.s32 %s25, %s37
      %s67 = ssub.s32 %s26, %s33
      %s68 = sor.u32 %s66, %s67
      %p69 = scmp.eq.s32.totalorder %s68, 0
      %s71 = sadd.s32 %s70, 1
      %s72 = scalar_select %p69, %s70, %s71
      %p75 = pneg %p69
      %p76 = scmp.eq.s32.totalorder %s18, 1
      %p77 = por %p75, %p76
      %p78 = scmp.ne.s32.totalorder %s70, %s73
      %p79 = scmp.eq.s32.totalorder %s18, 0
      %p80 = por %p78, %p79
      %p81 = scmp.ne.s32.totalorder %s70, %s73
      %p82 = scmp.eq.s32.totalorder %s23, 1
      %p83 = por %p81, %p82
      %p84 = scmp.ne.s32.totalorder %s73, %s74
      %p85 = scmp.eq.s32.totalorder %s23, 0
      %p86 = por %p84, %p85
      %p87 = scmp.ne.s32.totalorder %s73, %s74
      %p88 = scmp.eq.s32.totalorder %s24, 1
      %p89 = por %p87, %p88
      %p91 = scmp.ne.s32.totalorder %s74, %s90
      %p92 = scmp.eq.s32.totalorder %s24, 0
      %p93 = por %p91, %p92
      %s94 = ssub.s32 %s25, %s37
      %p95 = scmp.eq.s32.totalorder %s94, 0
      %s97 = sadd.s32 %s96, 1
      %s98 = scalar_select %p95, %s96, %s97
      %p101 = pneg %p95
      %p102 = scmp.eq.s32.totalorder %s18, 1
      %p103 = por %p101, %p102
      %p104 = scmp.ne.s32.totalorder %s96, %s99
      %p105 = scmp.eq.s32.totalorder %s18, 0
      %p106 = por %p104, %p105
      %p107 = scmp.ne.s32.totalorder %s96, %s99
      %p108 = scmp.eq.s32.totalorder %s23, 1
      %p109 = por %p107, %p108
      %p110 = scmp.ne.s32.totalorder %s99, %s100
      %p111 = scmp.eq.s32.totalorder %s23, 0
      %p112 = por %p110, %p111
      %p113 = scmp.ne.s32.totalorder %s99, %s100
      %p114 = scmp.eq.s32.totalorder %s24, 1
      %p115 = por %p113, %p114
      %p117 = scmp.ne.s32.totalorder %s100, %s116
      %p118 = scmp.eq.s32.totalorder %s24, 0
      %p119 = por %p117, %p118
      %s121 = sadd.s32 %s120, 1
      %p124 = scmp.eq.s32.totalorder %s18, 1
      %p125 = scmp.ne.s32.totalorder %s120, %s122
      %p126 = scmp.eq.s32.totalorder %s18, 0
      %p127 = por %p125, %p126
      %p128 = scmp.ne.s32.totalorder %s120, %s122
      %p129 = scmp.eq.s32.totalorder %s23, 1
      %p130 = por %p128, %p129
      %p131 = scmp.ne.s32.totalorder %s122, %s123
      %p132 = scmp.eq.s32.totalorder %s23, 0
      %p133 = por %p131, %p132
      %p134 = scmp.ne.s32.totalorder %s122, %s123
      %p135 = scmp.eq.s32.totalorder %s24, 1
      %p136 = por %p134, %p135
      %p138 = scmp.ne.s32.totalorder %s123, %s137
      %p139 = scmp.eq.s32.totalorder %s24, 0
      %p140 = por %p138, %p139
      %s142 = sadd.s32 %s141, 1
      %p145 = scmp.eq.s32.totalorder %s18, 1
      %p146 = scmp.ne.s32.totalorder %s141, %s143
      %p147 = scmp.eq.s32.totalorder %s18, 0
      %p148 = por %p146, %p147
      %p149 = scmp.ne.s32.totalorder %s141, %s143
      %p150 = scmp.eq.s32.totalorder %s23, 1
      %p151 = por %p149, %p150
      %p152 = scmp.ne.s32.totalorder %s143, %s144
      %p153 = scmp.eq.s32.totalorder %s23, 0
      %p154 = por %p152, %p153
      %p155 = scmp.ne.s32.totalorder %s143, %s144
      %p156 = scmp.eq.s32.totalorder %s24, 1
      %p157 = por %p155, %p156
      %p159 = scmp.ne.s32.totalorder %s144, %s158
      %p160 = scmp.eq.s32.totalorder %s24, 0
      %p161 = por %p159, %p160
      %s163 = sadd.s32 %s162, 1
      %p166 = scmp.eq.s32.totalorder %s18, 1
      %p167 = scmp.ne.s32.totalorder %s162, %s164
      %p168 = scmp.eq.s32.totalorder %s18, 0
      %p169 = por %p167, %p168
      %p170 = scmp.ne.s32.totalorder %s162, %s164
      %p171 = scmp.eq.s32.totalorder %s23, 1
      %p172 = por %p170, %p171
      %p173 = scmp.ne.s32.totalorder %s164, %s165
      %p174 = scmp.eq.s32.totalorder %s23, 0
      %p175 = por %p173, %p174
      %p176 = scmp.ne.s32.totalorder %s164, %s165
      %p177 = scmp.eq.s32.totalorder %s24, 1
      %p178 = por %p176, %p177
      %p180 = scmp.ne.s32.totalorder %s165, %s179
      %p181 = scmp.eq.s32.totalorder %s24, 0
      %p182 = por %p180, %p181
      %s183 = ssub.s32 %s25, %s37
      %s184 = ssub.s32 %s26, %s33
      %s185 = sor.u32 %s183, %s184
      %p186 = scmp.eq.s32.totalorder %s185, 0
      %s188 = sadd.s32 %s187, 1
      %s189 = scalar_select %p186, %s187, %s188
      %p192 = pneg %p186
      %p193 = scmp.eq.s32.totalorder %s18, 1
      %p194 = por %p192, %p193
      %p195 = scmp.ne.s32.totalorder %s187, %s190
      %p196 = scmp.eq.s32.totalorder %s18, 0
      %p197 = por %p195, %p196
      %p198 = scmp.ne.s32.totalorder %s187, %s190
      %p199 = scmp.eq.s32.totalorder %s23, 1
      %p200 = por %p198, %p199
      %p201 = scmp.ne.s32.totalorder %s190, %s191
      %p202 = scmp.eq.s32.totalorder %s23, 0
      %p203 = por %p201, %p202
      %p204 = scmp.ne.s32.totalorder %s190, %s191
      %p205 = scmp.eq.s32.totalorder %s24, 1
      %p206 = por %p204, %p205
      %p208 = scmp.ne.s32.totalorder %s191, %s207
      %p209 = scmp.eq.s32.totalorder %s24, 0
      %p210 = por %p208, %p209
      %p211 = scmp.le.s32.totalorder 1, %s18
      %p212 = scmp.lt.s32.totalorder %s18, 3
      %p213 = pnand %p211, %p212
      %p214 = pneg %p213
      // Predicated region
      $region9: #{tpu_custom_call.1} parent=5 // pred_check
        _
      $region10: #{tpu_custom_call.1} parent=5 // pred_check_branch
        %216 = sbr.rel (%p213) target = $region12
      $region11: #{tpu_custom_call.1} parent=5 // pred_region
        %s217 = ssub.s32 %s18, 1
        // Predicated region
        $region13: #{tpu_custom_call.1} parent=11 // pred_check
          %p218 = pneg %p133
        $region14: #{tpu_custom_call.1} parent=11 // pred_check_branch
          %220 = sbr.rel (%p218) target = $region16
        $region15: #{tpu_custom_call.1} parent=11 // pred_region
          _
        $region16: #{tpu_custom_call.1} parent=11 // pred_fallthru
          _
        // Predicated region
        $region17: #{tpu_custom_call.1} parent=11 // pred_check
          %p221 = pneg %p154
        $region18: #{tpu_custom_call.1} parent=11 // pred_check_branch
          %223 = sbr.rel (%p221) target = $region20
        $region19: #{tpu_custom_call.1} parent=11 // pred_region
          _
        $region20: #{tpu_custom_call.1} parent=11 // pred_fallthru
          _
        // Predicated region
        $region21: #{tpu_custom_call.1} parent=11 // pred_check
          %p224 = pneg %p175
        $region22: #{tpu_custom_call.1} parent=11 // pred_check_branch
          %226 = sbr.rel (%p224) target = $region24
        $region23: #{tpu_custom_call.1} parent=11 // pred_region
          _
        $region24: #{tpu_custom_call.1} parent=11 // pred_fallthru
          _
      $region12: #{tpu_custom_call.1} parent=5 // pred_fallthru
        _
      %p227 = scmp.lt.s32.totalorder %s18, 2
      // Predicated region
      $region25: #{tpu_custom_call.1} parent=5 // pred_check
        %p228 = pneg %p227
      $region26: #{tpu_custom_call.1} parent=5 // pred_check_branch
        %230 = sbr.rel (%p228) target = $region28
      $region27: #{tpu_custom_call.1} parent=5 // pred_region
        // Predicated region
        $region29: #{tpu_custom_call.1} parent=27 // pred_check
          %p231 = pneg %p52
        $region30: #{tpu_custom_call.1} parent=27 // pred_check_branch
          %233 = sbr.rel (%p231) target = $region32
        $region31: #{tpu_custom_call.1} parent=27 // pred_region
          %p234 = scmp.lt.s32.totalorder %s25, 1
          %s235 = scalar_select %p234, %s25, 1
          %p236 = scmp.lt.s32.totalorder %s26, 0
          %s237 = scalar_select %p236, %s26, 0
          %s238 = smul.addr %s235, 8
          %s239 = sadd.s32 %s237, %s238
          %s240 = smul.addr %s239, 8
          %s241 = scalar_lea.vmem %s0, %s240
        $region32: #{tpu_custom_call.1} parent=27 // pred_fallthru
          _
        // Predicated region
        $region33: #{tpu_custom_call.1} parent=27 // pred_check
          %p242 = pneg %p80
        $region34: #{tpu_custom_call.1} parent=27 // pred_check_branch
          %244 = sbr.rel (%p242) target = $region36
        $region35: #{tpu_custom_call.1} parent=27 // pred_region
          %s245 = sand.u32 %s70, 1
          %s246 = scalar_lea.sflag [#allocation3], %s245
          %s247 = sand.u32 %s70, 1
          %s248 = smul.addr %s247, 64
          %s249 = scalar_lea.vmem [#allocation2], %s248
          %s251 = ssub.s32 1024, 1024
          %252 = vsyncadd %s246, %s251
          %s253 = smul.addr %s25, 8
          %s254 = sadd.s32 %s26, %s253
          %s255 = smul.addr %s254, 128
          %s256 = scalar_lea.hbm %s1, %s255
          %s257 = sshll.u32 %s249, 4
          %s258 = int_to_ptr.vmem [resolvable:$true] %s257
          %263 = dma.hbm_to_vmem [thread:$0]  %s256, 1024, %s258, %s246, 128, 128, 8
        $region36: #{tpu_custom_call.1} parent=27 // pred_fallthru
          _
        // Predicated region
        $region37: #{tpu_custom_call.1} parent=27 // pred_check
          %p264 = pneg %p106
        $region38: #{tpu_custom_call.1} parent=27 // pred_check_branch
          %266 = sbr.rel (%p264) target = $region40
        $region39: #{tpu_custom_call.1} parent=27 // pred_region
          %p267 = scmp.lt.s32.totalorder %s25, 1
          %s268 = scalar_select %p267, %s25, 1
          %s269 = smul.addr %s268, 8
          %s270 = smul.addr %s269, 8
          %s271 = scalar_lea.vmem %s2, %s270
        $region40: #{tpu_custom_call.1} parent=27 // pred_fallthru
          _
      $region28: #{tpu_custom_call.1} parent=5 // pred_fallthru
        _
      %p272 = scmp.le.s32.totalorder 1, %s18
      %p273 = scmp.lt.s32.totalorder %s18, 3
      %p274 = pnand %p272, %p273
      %p275 = pneg %p274
      // Predicated region
      $region41: #{tpu_custom_call.1} parent=5 // pred_check
        _
      $region42: #{tpu_custom_call.1} parent=5 // pred_check_branch
        %277 = sbr.rel (%p274) target = $region44
      $region43: #{tpu_custom_call.1} parent=5 // pred_region
        %s278 = ssub.s32 %s18, 1
        %s279 = sand.u32 %s73, 1
        %s280 = scalar_lea.sflag [#allocation3], %s279
        %s281 = sand.u32 %s73, 1
        %s282 = smul.addr %s281, 64
        %s283 = scalar_lea.vmem [#allocation2], %s282
        // Predicated region
        $region45: #{tpu_custom_call.1} parent=43 // pred_check
          %p284 = pneg %p86
        $region46: #{tpu_custom_call.1} parent=43 // pred_check_branch
          %286 = sbr.rel (%p284) target = $region48
        $region47: #{tpu_custom_call.1} parent=43 // pred_region
          %287 = dma.done %s280, 1024
        $region48: #{tpu_custom_call.1} parent=43 // pred_fallthru
          _
        %p288 = scmp.lt.s32.totalorder %s27, 1
        %s289 = scalar_select %p288, %s27, 1
        %p290 = scmp.lt.s32.totalorder %s28, 0
        %s291 = scalar_select %p290, %s28, 0
        %s292 = smul.addr %s289, 8
        %s293 = sadd.s32 %s291, %s292
        %s294 = smul.addr %s293, 8
        %s295 = scalar_lea.vmem %s0, %s294
        %p296 = pneg %p58
        %p297 = pneg %p55
        %s298 = sand.u32 %s73, 1
        %s299 = scalar_lea.sflag [#allocation3], %s298
        %s300 = sand.u32 %s73, 1
        %s301 = smul.addr %s300, 64
        %s302 = scalar_lea.vmem [#allocation2], %s301
        %p303 = pneg %p86
        %p304 = pneg %p83
        %p305 = scmp.lt.s32.totalorder %s27, 1
        %s306 = scalar_select %p305, %s27, 1
        %s307 = smul.addr %s306, 8
        %s308 = smul.addr %s307, 8
        %s309 = scalar_lea.vmem %s2, %s308
        %p310 = pneg %p112
        %p311 = pneg %p109
        %p312 = pneg %p133
        %p313 = pneg %p130
        %p314 = pneg %p154
        %p315 = pneg %p151
        %p316 = pneg %p175
        %p317 = pneg %p172
        %p318 = pneg %p203
        %p319 = pneg %p200
        %s320 = sand.u32 %s190, 1
        %s321 = scalar_lea.sflag [#allocation4], %s320
        %s322 = sand.u32 %s190, 1
        %s323 = smul.addr %s322, 64
        %s324 = scalar_lea.vmem [#allocation5], %s323
        %p325 = scmp.lt.s32.totalorder %s27, 1
        %s326 = scalar_select %p325, %s27, 1
        %p327 = scmp.lt.s32.totalorder %s28, 0
        %s328 = scalar_select %p327, %s28, 0
        %s329 = smul.addr %s326, 8
        %s330 = sadd.s32 %s328, %s329
        %s331 = smul.addr %s330, 8
        %s332 = scalar_lea.vmem %s0, %s331
        %p333 = scmp.lt.s32.totalorder %s27, 1
        %s334 = scalar_select %p333, %s27, 1
        %s335 = smul.addr %s334, 8
        %s336 = smul.addr %s335, 8
        %s337 = scalar_lea.vmem %s2, %s336
        %v338 = vld [vmem:[%s332] sm:$0xff]
        %v339 = vld [vmem:[%s332 + $0x8] sm:$0xff]
        %v340 = vld [vmem:[%s332 + $0x10] sm:$0xff]
        %v341 = vld [vmem:[%s332 + $0x18] sm:$0xff]
        %v342 = vld [vmem:[%s332 + $0x20] sm:$0xff]
        %v343 = vld [vmem:[%s332 + $0x28] sm:$0xff]
        %v344 = vld [vmem:[%s332 + $0x30] sm:$0xff]
        %v345 = vld [vmem:[%s332 + $0x38] sm:$0xff]
        %v346 = vld [vmem:[%s283] sm:$0xff]
        %v347 = vld [vmem:[%s283 + $0x8] sm:$0xff]
        %v348 = vld [vmem:[%s283 + $0x10] sm:$0xff]
        %v349 = vld [vmem:[%s283 + $0x18] sm:$0xff]
        %v350 = vld [vmem:[%s283 + $0x20] sm:$0xff]
        %v351 = vld [vmem:[%s283 + $0x28] sm:$0xff]
        %v352 = vld [vmem:[%s283 + $0x30] sm:$0xff]
        %v353 = vld [vmem:[%s283 + $0x38] sm:$0xff]
        %v354 = vadd.f32 %v338, %v346
        %v355 = vadd.f32 %v339, %v347
        %v356 = vadd.f32 %v340, %v348
        %v357 = vadd.f32 %v341, %v349
        %v358 = vadd.f32 %v342, %v350
        %v359 = vadd.f32 %v343, %v351
        %v360 = vadd.f32 %v344, %v352
        %v361 = vadd.f32 %v345, %v353
        %v362 = vld [vmem:[%s3] sm:$0xff]
        %v363 = vld [vmem:[%s3 + $0x8] sm:$0xff]
        %v364 = vld [vmem:[%s4] sm:$0xff]
        %v365 = vld [vmem:[%s4 + $0x8] sm:$0xff]
        %367 = vset.pattern.permute.xlu0 0
        %368 = vperm.xlu0 %367, %v364
        %v369 = vpop.permute.xlu0 %368
        %372 = vset.pattern.permute.xlu0 0
        %373 = vperm.xlu0 %372, %v365
        %v374 = vpop.permute.xlu0 %373
        %vm376 = vcmask 523264
        %v378 = vsel %vm376, %v362, 0
        %v381 = vsel %vm376, %v363, 0
        %383 = vmatprep.subr.mxu0 0.0
        %384 = vmatpush1.msra.mxu0 0.0
        %385 = vmatprep.subr.mxu0 0.0
        %386 = vmatpush1.msra.mxu0 0.0
        %387 = vmatprep.subr.mxu0 0.0
        %388 = vmatpush1.msra.mxu0 0.0
        %389 = vmatprep.subr.mxu0 0.0
        %390 = vmatpush1.msra.mxu0 0.0
        %391 = vmatprep.subr.mxu0 0.0
        %392 = vmatpush1.msra.mxu0 0.0
        %393 = vmatprep.subr.mxu0 0.0
        %394 = vmatpush1.msra.mxu0 0.0
        %395 = vmatprep.subr.mxu0 0.0
        %396 = vmatpush1.msra.mxu0 0.0
        %397 = vmatprep.subr.mxu0 0.0
        %398 = vmatpush1.msra.mxu0 0.0
        %399 = vmatprep.subr.mxu0 0.0
        %400 = vmatpush1.msra.mxu0 %v361
        %401 = vmatprep.subr.mxu0 0.0
        %402 = vmatpush1.msra.mxu0 %v360
        %403 = vmatprep.subr.mxu0 0.0
        %404 = vmatpush1.msra.mxu0 %v359
        %405 = vmatprep.subr.mxu0 0.0
        %406 = vmatpush1.msra.mxu0 %v358
        %407 = vmatprep.subr.mxu0 0.0
        %408 = vmatpush1.msra.mxu0 %v357
        %409 = vmatprep.subr.mxu0 0.0
        %410 = vmatpush1.msra.mxu0 %v356
        %411 = vmatprep.subr.mxu0 0.0
        %412 = vmatpush1.msra.mxu0 %v355
        %413 = vmatprep.subr.mxu0 0.0
        %414 = vmatpush1.msra.mxu0 %v354
        %415 = vmatprep.subr.mxu0 0.0
        %416 = vmatpush2.msra.mxu0 0.0
        %417 = vmatprep.subr.mxu0 0.0
        %418 = vmatpush2.msra.mxu0 0.0
        %419 = vmatprep.subr.mxu0 0.0
        %420 = vmatpush2.msra.mxu0 0.0
        %421 = vmatprep.subr.mxu0 0.0
        %422 = vmatpush2.msra.mxu0 0.0
        %423 = vmatprep.subr.mxu0 0.0
        %424 = vmatpush2.msra.mxu0 0.0
        %425 = vmatprep.subr.mxu0 0.0
        %426 = vmatpush2.msra.mxu0 0.0
        %427 = vmatprep.subr.mxu0 0.0
        %428 = vmatpush2.msra.mxu0 0.0
        %429 = vmatprep.subr.mxu0 0.0
        %430 = vmatpush2.msra.mxu0 0.0
        %431 = vmatprep.subr.mxu0 0.0
        %432 = vmatpush2.msra.mxu0 0.0
        %433 = vmatprep.subr.mxu0 0.0
        %434 = vmatpush2.msra.mxu0 0.0
        %435 = vmatprep.subr.mxu0 0.0
        %436 = vmatpush2.msra.mxu0 0.0
        %437 = vmatprep.subr.mxu0 0.0
        %438 = vmatpush2.msra.mxu0 0.0
        %439 = vmatprep.subr.mxu0 0.0
        %440 = vmatpush2.msra.mxu0 0.0
        %441 = vmatprep.subr.mxu0 0.0
        %442 = vmatpush2.msra.mxu0 0.0
        %443 = vmatprep.subr.mxu0 0.0
        %444 = vmatpush2.msra.mxu0 0.0
        %445 = vmatprep.subr.mxu0 0.0
        %446 = vmatpush2.msra.mxu0 0.0
        %447 = vmatprep.mubr.f32.mxu0 0.0
        %448 = vmatmul.mubr.f32.gmra.mxu0 %v378
        %v449 = vpop.f32.mrf.mxu0
        %v450 = vadd.f32 %v369, %v449
        %v451 = vpop.f32.mrf.mxu0
        %452 = vmatprep.mubr.f32.mxu0 0.0
        %453 = vmatmul.mubr.f32.gmra.mxu0 %v381
        %v454 = vpop.f32.mrf.mxu0
        %v455 = vadd.f32 %v374, %v454
        %v456 = vpop.f32.mrf.mxu0
        %457 = vdwg.mxu0
        %v458 = vmax.f32 %v450, 0.0
        %v459 = vmax.f32 %v455, 0.0
        %v460 = vld [vmem:[%s5] sm:$0xff]
        %v461 = vld [vmem:[%s5 + $0x8] sm:$0xff]
        %v462 = vld [vmem:[%s5 + $0x10] sm:$0xff]
        %v463 = vld [vmem:[%s5 + $0x18] sm:$0xff]
        %v464 = vld [vmem:[%s5 + $0x20] sm:$0xff]
        %v465 = vld [vmem:[%s5 + $0x28] sm:$0xff]
        %v466 = vld [vmem:[%s5 + $0x30] sm:$0xff]
        %v467 = vld [vmem:[%s5 + $0x38] sm:$0xff]
        %v468 = vld [vmem:[%s337] sm:$0xff]
        %v469 = vld [vmem:[%s337 + $0x8] sm:$0xff]
        %v470 = vld [vmem:[%s337 + $0x10] sm:$0xff]
        %v471 = vld [vmem:[%s337 + $0x18] sm:$0xff]
        %v472 = vld [vmem:[%s337 + $0x20] sm:$0xff]
        %v473 = vld [vmem:[%s337 + $0x28] sm:$0xff]
        %v474 = vld [vmem:[%s337 + $0x30] sm:$0xff]
        %v475 = vld [vmem:[%s337 + $0x38] sm:$0xff]
        %477 = vset.pattern.permute.xlu0 0
        %478 = vperm.xlu0 %477, %v468
        %v479 = vpop.permute.xlu0 %478
        %482 = vset.pattern.permute.xlu0 0
        %483 = vperm.xlu0 %482, %v469
        %v484 = vpop.permute.xlu0 %483
        %487 = vset.pattern.permute.xlu0 0
        %488 = vperm.xlu0 %487, %v470
        %v489 = vpop.permute.xlu0 %488
        %492 = vset.pattern.permute.xlu0 0
        %493 = vperm.xlu0 %492, %v471
        %v494 = vpop.permute.xlu0 %493
        %497 = vset.pattern.permute.xlu0 0
        %498 = vperm.xlu0 %497, %v472
        %v499 = vpop.permute.xlu0 %498
        %502 = vset.pattern.permute.xlu0 0
        %503 = vperm.xlu0 %502, %v473
        %v504 = vpop.permute.xlu0 %503
        %507 = vset.pattern.permute.xlu0 0
        %508 = vperm.xlu0 %507, %v474
        %v509 = vpop.permute.xlu0 %508
        %512 = vset.pattern.permute.xlu0 0
        %513 = vperm.xlu0 %512, %v475
        %v514 = vpop.permute.xlu0 %513
        %vm516 = vcmask 130048
        %v518 = vsel %vm516, %v460, 0
        %v521 = vsel %vm516, %v461, 0
        %v524 = vsel %vm516, %v462, 0
        %v527 = vsel %vm516, %v463, 0
        %v530 = vsel %vm516, %v464, 0
        %v533 = vsel %vm516, %v465, 0
        %v536 = vsel %vm516, %v466, 0
        %v539 = vsel %vm516, %v467, 0
        %541 = vmatprep.subr.mxu0 0.0
        %542 = vmatpush1.msra.mxu0 0.0
        %543 = vmatprep.subr.mxu0 0.0
        %544 = vmatpush1.msra.mxu0 0.0
        %545 = vmatprep.subr.mxu0 0.0
        %546 = vmatpush1.msra.mxu0 0.0
        %547 = vmatprep.subr.mxu0 0.0
        %548 = vmatpush1.msra.mxu0 0.0
        %549 = vmatprep.subr.mxu0 0.0
        %550 = vmatpush1.msra.mxu0 0.0
        %551 = vmatprep.subr.mxu0 0.0
        %552 = vmatpush1.msra.mxu0 0.0
        %553 = vmatprep.subr.mxu0 0.0
        %554 = vmatpush1.msra.mxu0 0.0
        %555 = vmatprep.subr.mxu0 0.0
        %556 = vmatpush1.msra.mxu0 0.0
        %557 = vmatprep.subr.mxu0 0.0
        %558 = vmatpush1.msra.mxu0 0.0
        %559 = vmatprep.subr.mxu0 0.0
        %560 = vmatpush1.msra.mxu0 0.0
        %561 = vmatprep.subr.mxu0 0.0
        %562 = vmatpush1.msra.mxu0 0.0
        %563 = vmatprep.subr.mxu0 0.0
        %564 = vmatpush1.msra.mxu0 0.0
        %565 = vmatprep.subr.mxu0 0.0
        %566 = vmatpush1.msra.mxu0 0.0
        %567 = vmatprep.subr.mxu0 0.0
        %568 = vmatpush1.msra.mxu0 0.0
        %569 = vmatprep.subr.mxu0 0.0
        %570 = vmatpush1.msra.mxu0 %v459
        %571 = vmatprep.subr.mxu0 0.0
        %572 = vmatpush1.msra.mxu0 %v458
        %573 = vmatprep.subr.mxu0 0.0
        %574 = vmatpush2.msra.mxu0 0.0
        %575 = vmatprep.subr.mxu0 0.0
        %576 = vmatpush2.msra.mxu0 0.0
        %577 = vmatprep.subr.mxu0 0.0
        %578 = vmatpush2.msra.mxu0 0.0
        %579 = vmatprep.subr.mxu0 0.0
        %580 = vmatpush2.msra.mxu0 0.0
        %581 = vmatprep.subr.mxu0 0.0
        %582 = vmatpush2.msra.mxu0 0.0
        %583 = vmatprep.subr.mxu0 0.0
        %584 = vmatpush2.msra.mxu0 0.0
        %585 = vmatprep.subr.mxu0 0.0
        %586 = vmatpush2.msra.mxu0 0.0
        %587 = vmatprep.subr.mxu0 0.0
        %588 = vmatpush2.msra.mxu0 0.0
        %589 = vmatprep.subr.mxu0 0.0
        %590 = vmatpush2.msra.mxu0 0.0
        %591 = vmatprep.subr.mxu0 0.0
        %592 = vmatpush2.msra.mxu0 0.0
        %593 = vmatprep.subr.mxu0 0.0
        %594 = vmatpush2.msra.mxu0 0.0
        %595 = vmatprep.subr.mxu0 0.0
        %596 = vmatpush2.msra.mxu0 0.0
        %597 = vmatprep.subr.mxu0 0.0
        %598 = vmatpush2.msra.mxu0 0.0
        %599 = vmatprep.subr.mxu0 0.0
        %600 = vmatpush2.msra.mxu0 0.0
        %601 = vmatprep.subr.mxu0 0.0
        %602 = vmatpush2.msra.mxu0 0.0
        %603 = vmatprep.subr.mxu0 0.0
        %604 = vmatpush2.msra.mxu0 0.0
        %605 = vmatprep.mubr.f32.mxu0 0.0
        %606 = vmatmul.mubr.f32.gmra.mxu0 %v518
        %v607 = vpop.f32.mrf.mxu0
        %v608 = vadd.f32 %v479, %v607
        %v609 = vpop.f32.mrf.mxu0
        %610 = vmatprep.mubr.f32.mxu0 0.0
        %611 = vmatmul.mubr.f32.gmra.mxu0 %v521
        %v612 = vpop.f32.mrf.mxu0
        %v613 = vadd.f32 %v484, %v612
        %v614 = vpop.f32.mrf.mxu0
        %615 = vmatprep.mubr.f32.mxu0 0.0
        %616 = vmatmul.mubr.f32.gmra.mxu0 %v524
        %v617 = vpop.f32.mrf.mxu0
        %v618 = vadd.f32 %v489, %v617
        %v619 = vpop.f32.mrf.mxu0
        %620 = vmatprep.mubr.f32.mxu0 0.0
        %621 = vmatmul.mubr.f32.gmra.mxu0 %v527
        %v622 = vpop.f32.mrf.mxu0
        %v623 = vadd.f32 %v494, %v622
        %v624 = vpop.f32.mrf.mxu0
        %625 = vmatprep.mubr.f32.mxu0 0.0
        %626 = vmatmul.mubr.f32.gmra.mxu0 %v530
        %v627 = vpop.f32.mrf.mxu0
        %v628 = vadd.f32 %v499, %v627
        %v629 = vpop.f32.mrf.mxu0
        %630 = vmatprep.mubr.f32.mxu0 0.0
        %631 = vmatmul.mubr.f32.gmra.mxu0 %v533
        %v632 = vpop.f32.mrf.mxu0
        %v633 = vadd.f32 %v504, %v632
        %v634 = vpop.f32.mrf.mxu0
        %635 = vmatprep.mubr.f32.mxu0 0.0
        %636 = vmatmul.mubr.f32.gmra.mxu0 %v536
        %v637 = vpop.f32.mrf.mxu0
        %v638 = vadd.f32 %v509, %v637
        %v639 = vpop.f32.mrf.mxu0
        %640 = vmatprep.mubr.f32.mxu0 0.0
        %641 = vmatmul.mubr.f32.gmra.mxu0 %v539
        %v642 = vpop.f32.mrf.mxu0
        %v643 = vadd.f32 %v514, %v642
        %v644 = vpop.f32.mrf.mxu0
        %645 = vdwg.mxu0
        %v646 = vtanh.pop %v608
        %v647 = vtanh.pop %v613
        %v648 = vtanh.pop %v618
        %v649 = vtanh.pop %v623
        %v650 = vtanh.pop %v628
        %v651 = vtanh.pop %v633
        %v652 = vtanh.pop %v638
        %v653 = vtanh.pop %v643
        %v654 = vsub.f32 %v338, %v346
        %v655 = vsub.f32 %v339, %v347
        %v656 = vsub.f32 %v340, %v348
        %v657 = vsub.f32 %v341, %v349
        %v658 = vsub.f32 %v342, %v350
        %v659 = vsub.f32 %v343, %v351
        %v660 = vsub.f32 %v344, %v352
        %v661 = vsub.f32 %v345, %v353
        %v662 = vmul.f32 %v654, %v646
        %v663 = vmul.f32 %v655, %v647
        %v664 = vmul.f32 %v656, %v648
        %v665 = vmul.f32 %v657, %v649
        %v666 = vmul.f32 %v658, %v650
        %v667 = vmul.f32 %v659, %v651
        %v668 = vmul.f32 %v660, %v652
        %v669 = vmul.f32 %v661, %v653
        %v670 = vadd.f32 %v354, %v662
        %v671 = vadd.f32 %v355, %v663
        %v672 = vadd.f32 %v356, %v664
        %v673 = vadd.f32 %v357, %v665
        %v674 = vadd.f32 %v358, %v666
        %v675 = vadd.f32 %v359, %v667
        %v676 = vadd.f32 %v360, %v668
        %v677 = vadd.f32 %v361, %v669
        %678 = vst.msk [vmem:[%s324] sm:$0xff] %vm376, %v670
        %679 = vst.msk [vmem:[%s324 + $0x8] sm:$0xff] %vm376, %v671
        %680 = vst.msk [vmem:[%s324 + $0x10] sm:$0xff] %vm376, %v672
        %681 = vst.msk [vmem:[%s324 + $0x18] sm:$0xff] %vm376, %v673
        %682 = vst.msk [vmem:[%s324 + $0x20] sm:$0xff] %vm376, %v674
        %683 = vst.msk [vmem:[%s324 + $0x28] sm:$0xff] %vm376, %v675
        %684 = vst.msk [vmem:[%s324 + $0x30] sm:$0xff] %vm376, %v676
        %685 = vst.msk [vmem:[%s324 + $0x38] sm:$0xff] %vm376, %v677
        %s686 = sand.u32 %s190, 1
        %s687 = scalar_lea.sflag [#allocation4], %s686
        %s688 = sand.u32 %s190, 1
        %s689 = smul.addr %s688, 64
        %s690 = scalar_lea.vmem [#allocation5], %s689
        // Predicated region
        $region49: #{tpu_custom_call.1} parent=43 // pred_check
          %p691 = pneg %p200
        $region50: #{tpu_custom_call.1} parent=43 // pred_check_branch
          %693 = sbr.rel (%p691) target = $region52
        $region51: #{tpu_custom_call.1} parent=43 // pred_region
          %s695 = ssub.s32 1024, 1024
          %696 = vsyncadd %s687, %s695
          %s697 = smul.addr %s27, 8
          %s698 = sadd.s32 %s28, %s697
          %s699 = smul.addr %s698, 128
          %s700 = scalar_lea.hbm %s6, %s699
          %s701 = sshll.u32 %s690, 4
          %s702 = int_to_ptr.vmem [resolvable:$true] %s701
          %707 = dma.vmem_to_hbm [thread:$0]  %s702, 1024, %s700, %s687, 128, 128, 8
        $region52: #{tpu_custom_call.1} parent=43 // pred_fallthru
          _
      $region44: #{tpu_custom_call.1} parent=5 // pred_fallthru
        _
      %p708 = scmp.le.s32.totalorder 2, %s18
      // Predicated region
      $region53: #{tpu_custom_call.1} parent=5 // pred_check
        %p709 = pneg %p708
      $region54: #{tpu_custom_call.1} parent=5 // pred_check_branch
        %711 = sbr.rel (%p709) target = $region56
      $region55: #{tpu_custom_call.1} parent=5 // pred_region
        %s712 = ssub.s32 %s18, 2
        // Predicated region
        $region57: #{tpu_custom_call.1} parent=55 // pred_check
          %p713 = pneg %p206
        $region58: #{tpu_custom_call.1} parent=55 // pred_check_branch
          %715 = sbr.rel (%p713) target = $region60
        $region59: #{tpu_custom_call.1} parent=55 // pred_region
          %s716 = sand.u32 %s191, 1
          %s717 = scalar_lea.sflag [#allocation4], %s716
          %s718 = sand.u32 %s191, 1
          %s719 = smul.addr %s718, 64
          %s720 = scalar_lea.vmem [#allocation5], %s719
          %721 = dma.done %s717, 1024
        $region60: #{tpu_custom_call.1} parent=55 // pred_fallthru
          _
      $region56: #{tpu_custom_call.1} parent=5 // pred_fallthru
        _
    $region6: #{tpu_custom_call.1} parent=1 // loop_footer
      %s22 = sadd.s32 1, %s18
    $region7: #{tpu_custom_call.1} parent=1 // loop_footer_branch
      %17 = sbr.rel target = $region3
    $region8: #{tpu_custom_call.1} parent=1 // loop_exit
      _
    %722 = vsyncpa [#allocation3], 1
    %s723 = scalar_lea.sflag [#allocation3], 1
    %724 = vsyncpa %s723, 1
    %725 = vsyncpa [#allocation4], 1
    %s726 = scalar_lea.sflag [#allocation4], 1
    %727 = vsyncpa %s726, 1

</llo_original>
